<compile_context>
chip_gen: v7x
topology: tpu7x:2x2x1
jax: 0.10.0
libtpu: 0.0.40
codegen_flags: <defaults>
</compile_context>

<pallas_src>
import functools
import math

import jax
import jax.numpy as jnp
from jax.experimental import pallas as pl
from jax.experimental.pallas import tpu as pltpu


def _fixed_scaling_kernel(x_ref, mu_ref, inv_std_ref, z_ref):
    # x_ref       : (TB, d_eff)  VMEM, native input dtype
    # mu_ref      : (1,  d_eff)  VMEM, f32 (resident across grid)
    # inv_std_ref : (1,  d_eff)  VMEM, f32 (resident across grid)
    # z_ref       : (TB, d_eff)  VMEM, output dtype (== input dtype)
    x = x_ref[...].astype(jnp.float32)
    z = (x - mu_ref[...]) * inv_std_ref[...]   # VPU only; no per-element divide
    z_ref[...] = z.astype(z_ref.dtype)


def _vmem_budget_bytes():
    """Chip-aware scoped-VMEM budget for this call."""
    cap = None
    try:
        info = pltpu.get_tpu_info()
        cap = getattr(info, "vmem_capacity_bytes", None)
    except Exception:
        cap = None
    if cap is None:
        cap = 64 * 1024 * 1024  # conservative (v7x per-TC physical)
    if cap <= 64 * 1024 * 1024:
        return 40 * 1024 * 1024  # v7x: stay well under 64 MiB physical
    return 64 * 1024 * 1024      # v5e/v6e: plenty of headroom under 128 MiB


def _sublane_multiple(itemsize):
    # Packed vreg sublane multiple: 8 for 32-bit, 16 for 16-bit, 32 for 8-bit.
    return {4: 8, 2: 16, 1: 32}.get(itemsize, 8)


def _pick_batch_tile(b_rows, d_eff, itemsize, vmem_budget):
    """Pick the batch tile.

    Double-buffered x tile + double-buffered z tile ~= 4 * tile bytes, so the
    per-tile target is ~budget/5 (headroom for mu/inv_std rows + scratch).
    Guarantees >= 2 grid programs when the batch is large enough, so v7x's two
    TensorCores both get work.
    """
    sub = _sublane_multiple(itemsize)
    target_tile_bytes = max(1, vmem_budget // 5)
    rows = max(1, target_tile_bytes // max(1, d_eff * itemsize))
    tb = min(b_rows, rows)

    # Ensure >= 2 programs for megacore sharding when splitting is legal.
    if tb >= b_rows and b_rows >= 2 * sub:
        tb = pl.cdiv(b_rows, 2)

    if tb < b_rows:
        tb = max(sub, (tb // sub) * sub)   # align to packed sublane tile
        tb = min(tb, b_rows)               # never exceed the array dim
        if tb < b_rows and tb % sub != 0:
            tb = b_rows                    # fall back to full dim (always valid)
    return tb


@functools.partial(jax.jit, static_argnames=())
def fixed_scaling_step_forward(x, mu, std):
    """Pallas forward for FixedScalingStep.

    Args:
      x:   [B, d] float array (f32 or bf16)
      mu:  [d]    parameters
      std: [d]    parameters (strictly positive)
    Returns:
      z:       [B, d] same dtype as x,  z = (x - mu) / std
      logdet:  [B]    float32,  == -sum(log(std)) for every row
    """
    B, d = x.shape
    out_dtype = x.dtype
    itemsize = jnp.dtype(x.dtype).itemsize

    mu_f32 = mu.astype(jnp.float32)
    std_f32 = std.astype(jnp.float32)
    inv_std_f32 = 1.0 / std_f32            # exact f32 reciprocal, d elems, once

    # logdet is one scalar replicated over the batch -> compute in wrapper.
    logdet_scalar = -jnp.sum(jnp.log(std_f32))
    logdet = jnp.full((B,), logdet_scalar, dtype=jnp.float32)

    # Generalized lane folding: make the last dim a multiple of 128 whenever
    # the batch allows it, so stores are full-width vst (not masked vst.msk).
    g = math.gcd(d, 128)
    k = 128 // g
    if k > 1 and (B % k != 0):
        k = 1
    d_eff = d * k
    b_rows = B // k

    x_f = x.reshape(b_rows, d_eff)
    mu_row = jnp.tile(mu_f32, k).reshape(1, d_eff)
    inv_std_row = jnp.tile(inv_std_f32, k).reshape(1, d_eff)

    vmem_budget = _vmem_budget_bytes()
    tb = _pick_batch_tile(b_rows, d_eff, itemsize, vmem_budget)
    grid = (pl.cdiv(b_rows, tb),)

    z_f = pl.pallas_call(
        _fixed_scaling_kernel,
        out_shape=jax.ShapeDtypeStruct((b_rows, d_eff), out_dtype),
        grid=grid,
        in_specs=[
            pl.BlockSpec((tb, d_eff), lambda i: (i, 0)),   # x: tiled over batch
            pl.BlockSpec((1, d_eff), lambda i: (0, 0)),    # mu: resident
            pl.BlockSpec((1, d_eff), lambda i: (0, 0)),    # inv_std: resident
        ],
        out_specs=pl.BlockSpec((tb, d_eff), lambda i: (i, 0)),
        compiler_params=pltpu.CompilerParams(
            dimension_semantics=("parallel",),
            vmem_limit_bytes=vmem_budget,
        ),
    )(x_f, mu_row, inv_std_row)

    z = z_f.reshape(B, d)
    return z, logdet


if __name__ == "__main__":
    key = jax.random.PRNGKey(0)

    # Case 1: small shapes consistent with the module (x is [B, d]).
    B, d = 8, 32
    mu = jnp.linspace(-1.0, 1.0, d, dtype=jnp.float32)
    std = 0.5 + 0.05 * jnp.arange(d, dtype=jnp.float32)   # strictly positive
    k1, k2 = jax.random.split(key)
    x = jax.random.normal(k1, (B, d), dtype=jnp.float32)

    z, logdet = fixed_scaling_step_forward(x, mu, std)
    jax.block_until_ready((z, logdet))

    z_ref = (x - mu[None, :]) / std[None, :]
    ld_ref = -jnp.sum(jnp.log(std)) * jnp.ones((B,), jnp.float32)
    assert z.shape == (B, d) and logdet.shape == (B,)
    assert jnp.allclose(z, z_ref, atol=1e-5, rtol=1e-5)
    assert jnp.allclose(logdet, ld_ref, atol=1e-5, rtol=1e-5)

    # Case 2: exercises the generalized gcd lane-fold (d = 48 -> k = 8).
    B2, d2 = 16, 48
    mu2 = jnp.cos(jnp.arange(d2, dtype=jnp.float32))
    std2 = 0.25 + 0.02 * jnp.arange(d2, dtype=jnp.float32)
    x2 = jax.random.normal(k2, (B2, d2), dtype=jnp.float32)

    z2, logdet2 = fixed_scaling_step_forward(x2, mu2, std2)
    jax.block_until_ready((z2, logdet2))

    z2_ref = (x2 - mu2[None, :]) / std2[None, :]
    ld2_ref = -jnp.sum(jnp.log(std2)) * jnp.ones((B2,), jnp.float32)
    assert jnp.allclose(z2, z2_ref, atol=1e-5, rtol=1e-5)
    assert jnp.allclose(logdet2, ld2_ref, atol=1e-5, rtol=1e-5)

    print("KERNEL_OK")
</pallas_src>

<mosaic_0001>
module attributes {stable_mosaic.version = 11 : i64} {
  func.func @_fixed_scaling_kernel(%arg0: i32, %arg1: memref<2x128xf32, #tpu.memory_space<vmem>>, %arg2: memref<1x128xf32, #tpu.memory_space<vmem>>, %arg3: memref<1x128xf32, #tpu.memory_space<vmem>>, %arg4: memref<2x128xf32, #tpu.memory_space<vmem>>) attributes {dimension_semantics = [#tpu.dimension_semantics<parallel>], iteration_bounds = array<i64: 1>, scalar_prefetch = 0 : i64, scratch_operands = 0 : i64, tpu.core_type = #tpu.core_type<tc>, window_params = [{transform_indices = @transform_0, window_bounds = array<i64: 2, 128>}, {pipeline_mode = #tpu.pipeline_mode<synchronous>, transform_indices = @transform_1, window_bounds = array<i64: 1, 128>}, {pipeline_mode = #tpu.pipeline_mode<synchronous>, transform_indices = @transform_2, window_bounds = array<i64: 1, 128>}, {transform_indices = @transform_3, window_bounds = array<i64: 2, 128>}]} {
    %c0 = arith.constant 0 : index
    %c0_0 = arith.constant 0 : index
    %0 = vector.load %arg1[%c0, %c0_0] : memref<2x128xf32, #tpu.memory_space<vmem>>, vector<2x128xf32>
    %c0_1 = arith.constant 0 : index
    %c0_2 = arith.constant 0 : index
    %1 = vector.load %arg2[%c0_1, %c0_2] : memref<1x128xf32, #tpu.memory_space<vmem>>, vector<1x128xf32>
    %2 = vector.broadcast %1 : vector<1x128xf32> to vector<2x128xf32>
    %3 = arith.subf %0, %2 : vector<2x128xf32>
    %c0_3 = arith.constant 0 : index
    %c0_4 = arith.constant 0 : index
    %4 = vector.load %arg3[%c0_3, %c0_4] : memref<1x128xf32, #tpu.memory_space<vmem>>, vector<1x128xf32>
    %5 = vector.broadcast %4 : vector<1x128xf32> to vector<2x128xf32>
    %6 = arith.mulf %3, %5 : vector<2x128xf32>
    %c0_5 = arith.constant 0 : index
    %c0_6 = arith.constant 0 : index
    %7 = vector.load %arg4[%c0_5, %c0_6] : memref<2x128xf32, #tpu.memory_space<vmem>>, vector<2x128xf32>
    tpu.vector_store %arg4[%c0_5, %c0_6], %6 {strides = array<i32>} : memref<2x128xf32, #tpu.memory_space<vmem>>, vector<2x128xf32>,
    return
  }
  func.func @transform_0(%arg0: i32) -> (i32, i32) {
    %c0_i32 = arith.constant 0 : i32
    %c0_i32_0 = arith.constant 0 : i32
    return %arg0, %c0_i32 : i32, i32
  }
  func.func @transform_1(%arg0: i32) -> (i32, i32) {
    %c0_i32 = arith.constant 0 : i32
    %c0_i32_0 = arith.constant 0 : i32
    %c0_i32_1 = arith.constant 0 : i32
    return %c0_i32, %c0_i32_0 : i32, i32
  }
  func.func @transform_2(%arg0: i32) -> (i32, i32) {
    %c0_i32 = arith.constant 0 : i32
    %c0_i32_0 = arith.constant 0 : i32
    %c0_i32_1 = arith.constant 0 : i32
    return %c0_i32, %c0_i32_0 : i32, i32
  }
  func.func @transform_3(%arg0: i32) -> (i32, i32) {
    %c0_i32 = arith.constant 0 : i32
    %c0_i32_0 = arith.constant 0 : i32
    return %arg0, %c0_i32 : i32, i32
  }
}

</mosaic_0001>

<llo_original>
// kernel: tile.18
$region0: #{tile.18}
  #allocation0 [shape = 's32[1]{0}', space=sflag, size = 0x4, scoped, tag = 'scoped memory for tile.18']
  %s0 = inlined_call_operand.vmem [shape: f32[32], index: 0, kind: input, shape index: {}]
  %s1 = inlined_call_operand.vmem [shape: f32[4,32], index: 1, kind: output, shape index: {}]
  // Predicated region
  $region2: #{tile.18} parent=0 // pred_check
    _
  $region3: #{tile.18} parent=0 // pred_check_branch
    %3 = sbr.rel (0) target = $region5
  $region4: #{tile.18} parent=0 // pred_region
    _
  $region5: #{tile.18} parent=0 // pred_fallthru
    _
  %v4 = vld [vmem:[%s0] ss:$0 sm:$0xff]
  %5 = vst [vmem:[%s1] sm:$0xf] %v4

// kernel: tile.19
$region0: #{tile.19}
  %s0 = inlined_call_operand.vmem [shape: f32[4,32], index: 0, kind: input, shape index: {}]
  %s1 = inlined_call_operand.vmem [shape: f32[1,128], index: 1, kind: output, shape index: {}]
  $region1: #{tile.19} parent=0
    #allocation0 [shape = 'u8[4096]{0}', space=vmem, size = 0x1000, scoped, tag = 'scoped mem for output reshape']
    #allocation1 [shape = 'u8[4096]{0}', space=vmem, size = 0x1000, scoped, tag = 'scoped mem for input reshape']
    %s3 = sshllo.u32 0, 4
    %v4 = vld [vmem:[%s0] sm:%s3]
    %5 = vst [vmem:[#allocation1] sm:%s3] %v4
    %v6 = vld [vmem:[#allocation1] sm:$0x1]
    %vm7 = vcmask 261120
    %8 = vst.msk [vmem:[#allocation0] sm:$0x1] %vm7, %v6
    %s9 = scalar_lea.vmem [#allocation1], 3
    %v10 = vld [vmem:[%s9] sm:$0x1]
    %11 = vrot.lane.b32.xlu0 %v10, 96
    %v12 = vpop.permute.xlu0 %11
    %vm13 = vcmask 1048320
    %14 = vst.msk [vmem:[#allocation0] sm:$0x1] %vm13, %v12
    %s15 = scalar_lea.vmem [#allocation1], 2
    %v16 = vld [vmem:[%s15] sm:$0x1]
    %17 = vrot.lane.b32.xlu0 %v16, 64
    %v18 = vpop.permute.xlu0 %17
    %vm19 = vcmask 785920
    %20 = vst.msk [vmem:[#allocation0] sm:$0x1] %vm19, %v18
    %s21 = scalar_lea.vmem [#allocation1], 1
    %v22 = vld [vmem:[%s21] sm:$0x1]
    %23 = vrot.lane.b32.xlu0 %v22, 32
    %v24 = vpop.permute.xlu0 %23
    %vm25 = vcmask 523520
    %26 = vst.msk [vmem:[#allocation0] sm:$0x1] %vm25, %v24
    %s28 = sshllo.u32 0, 1
    %v30 = vld [vmem:[#allocation0] sm:%s28]
    %s31 = sshllo.u32 0, 1
    %32 = vst [vmem:[%s1] sm:%s31] %v30

// kernel: fixed_scaling_step_forward.1
$region0: #{fixed_scaling_step_forward.1}
  #allocation0 [shape = 'u32[]', space=smem, size = 0x4, offset = 0x4, fixed_abs, tag = 'smem constant byte address 0x4 - core index']
  #allocation1 [shape = 'u32[144,128]{1,0:T(1,128)}', space=vmem, size = 0x12000, scoped, tag = 'internal scratch']
  %s0 = inlined_call_operand.vmem [shape: f32[2,128], index: 0, kind: input, shape index: {}]
  %s1 = inlined_call_operand.vmem [shape: f32[1,128], index: 1, kind: input, shape index: {}]
  %s2 = inlined_call_operand.vmem [shape: f32[1,128], index: 2, kind: input, shape index: {}]
  %s3 = inlined_call_operand.vmem [shape: f32[2,128], index: 3, kind: output, shape index: {}]
  %s4 = sld [smem:[#allocation0]]
  $region22: #{fixed_scaling_step_forward.1} parent=0
    _
  %s6 = ssub.s32 1, %s4
  %s7 = scalar_select 0, %s6, %s4
  // Predicated region
  $region2: #{fixed_scaling_step_forward.1} parent=0 // pred_check
    _
  $region3: #{fixed_scaling_step_forward.1} parent=0 // pred_check_branch
    %9 = sbr.rel (0) target = $region5
  $region4: #{fixed_scaling_step_forward.1} parent=0 // pred_region
    _
  $region5: #{fixed_scaling_step_forward.1} parent=0 // pred_fallthru
    _
  // Predicated region
  $region6: #{fixed_scaling_step_forward.1} parent=0 // pred_check
    _
  $region7: #{fixed_scaling_step_forward.1} parent=0 // pred_check_branch
    %11 = sbr.rel (0) target = $region9
  $region8: #{fixed_scaling_step_forward.1} parent=0 // pred_region
    _
  $region9: #{fixed_scaling_step_forward.1} parent=0 // pred_fallthru
    _
  // Predicated region
  $region10: #{fixed_scaling_step_forward.1} parent=0 // pred_check
    _
  $region11: #{fixed_scaling_step_forward.1} parent=0 // pred_check_branch
    %13 = sbr.rel (0) target = $region13
  $region12: #{fixed_scaling_step_forward.1} parent=0 // pred_region
    _
  $region13: #{fixed_scaling_step_forward.1} parent=0 // pred_fallthru
    _
  %v14 = vld [vmem:[%s0] sm:$0x3]
  %v15 = vld [vmem:[%s1] sm:$0x1]
  %v17 = vlaneseq
  %v18 = vshrl.u32 %v17, 7
  %v19 = vsub.s32 0, %v18
  %v20 = vrot.slane %v15, %v19
  %v22 = vsub.f32 %v14, %v20
  %v23 = vld [vmem:[%s2] sm:$0x1]
  %v25 = vlaneseq
  %v26 = vshrl.u32 %v25, 7
  %v27 = vsub.s32 0, %v26
  %v28 = vrot.slane %v23, %v27
  %v30 = vmul.f32 %v22, %v28
  %31 = vst [vmem:[%s3] sm:$0x3] %v30
  // Predicated region
  $region14: #{fixed_scaling_step_forward.1} parent=0 // pred_check
    _
  $region15: #{fixed_scaling_step_forward.1} parent=0 // pred_check_branch
    %33 = sbr.rel (0) target = $region17
  $region16: #{fixed_scaling_step_forward.1} parent=0 // pred_region
    _
  $region17: #{fixed_scaling_step_forward.1} parent=0 // pred_fallthru
    _
  // Predicated region
  $region18: #{fixed_scaling_step_forward.1} parent=0 // pred_check
    _
  $region19: #{fixed_scaling_step_forward.1} parent=0 // pred_check_branch
    %35 = sbr.rel (0) target = $region21
  $region20: #{fixed_scaling_step_forward.1} parent=0 // pred_region
    _
  $region21: #{fixed_scaling_step_forward.1} parent=0 // pred_fallthru
    _

</llo_original>
